<compile_context>
chip_gen: v7x
topology: tpu7x:2x2x1
jax: 0.10.0
libtpu: 0.0.40
codegen_flags: <defaults>
</compile_context>

<pallas_src>
import jax
import jax.numpy as jnp
from jax.experimental import pallas as pl
from jax.experimental.pallas import tpu as pltpu


def _round_up(a, m):
    return ((a + m - 1) // m) * m


def _pick_target_block_bytes():
    """~8 MiB input tiles on v5e/v6e (128 MiB VMEM), ~4 MiB on v7x / unknown."""
    try:
        vmem_cap = int(getattr(pltpu.get_tpu_info(), "vmem_capacity_bytes", 0))
    except Exception:
        vmem_cap = 0
    if vmem_cap > (64 << 20):   # v5e / v6e: 128 MiB physical VMEM per core
        return 8 << 20
    return 4 << 20              # v7x (64 MiB per TC) or undetected: conservative


def _normalize_kernel_resident(x_ref, scale_ref, bias_ref, o_ref):
    # x_ref / o_ref : (tr, t_hw) tile.  scale_ref / bias_ref : full (R_pad, 1)
    # resident block; slice the rows belonging to this grid step.
    tr = x_ref.shape[0]
    r0 = pl.program_id(0) * tr
    if tr % 8 == 0:
        r0 = pl.multiple_of(r0, 8)
    s = scale_ref[pl.ds(r0, tr), :]
    b = bias_ref[pl.ds(r0, tr), :]
    o_ref[...] = (x_ref[...].astype(jnp.float32) * s + b).astype(o_ref.dtype)


def _normalize_kernel_streamed(x_ref, scale_ref, bias_ref, o_ref):
    # Fallback for very large R: scale/bias arrive as per-block (tr, 1) tiles.
    o_ref[...] = (x_ref[...].astype(jnp.float32) * scale_ref[...]
                  + bias_ref[...]).astype(o_ref.dtype)


def normalize(x, mean, std, *, target_block_bytes=None):
    """x: (N, C, H, W); mean, std: (C,). Returns (x - mean_c) / std_c."""
    N, C, H, W = x.shape
    HW = H * W
    R = N * C
    itemsize = jnp.dtype(x.dtype).itemsize
    bytes_per_row = HW * itemsize

    if target_block_bytes is None:
        target_block_bytes = _pick_target_block_bytes()

    # Copy-free reshape: each row is one (n, c) spatial plane, lane-dense.
    x2 = x.reshape(R, HW)

    # Fold normalization into a single FMA (computed in f32, cast back).
    scale_c = 1.0 / std.astype(jnp.float32)
    bias_c = -mean.astype(jnp.float32) * scale_c
    scale_rows = jnp.tile(scale_c, N).reshape(R, 1)
    bias_rows = jnp.tile(bias_c, N).reshape(R, 1)

    # --- Tile selection -----------------------------------------------------
    if 8 * bytes_per_row <= target_block_bytes:
        # Full rows per block; pick as many rows (multiple of 8) as fit budget.
        t_hw = HW
        rows = max(8, (target_block_bytes // bytes_per_row) // 8 * 8)
        tr = R if rows >= R else rows
    else:
        # Huge H*W: tile the lane axis too (multiple of 128) so 4x
        # double-buffered blocks cannot exceed scoped VMEM.
        tr = 8 if R >= 8 else R
        cols = target_block_bytes // (tr * itemsize)
        t_hw = min(HW, max(128, (cols // 128) * 128))
    grid_hw = pl.cdiv(HW, t_hw)

    # Ensure >= 2 row blocks when possible so v7x's 2 TensorCores share the
    # work (no-op on single-core v5e/v6e; min() never grows the tile).
    if grid_hw == 1 and R > 8:
        tr = min(tr, _round_up(pl.cdiv(R, 2), 8))
    grid_r = pl.cdiv(R, tr)

    # Pad per-row scale/bias to an exact multiple of the row block so in-kernel
    # slices of the resident block never read past the allocation.
    R_pad = grid_r * tr
    if R_pad > R:
        scale_rows = jnp.pad(scale_rows, ((0, R_pad - R), (0, 0)))
        bias_rows = jnp.pad(bias_rows, ((0, R_pad - R), (0, 0)))

    # Resident scale/bias (fetched once, zero per-step DMAs) unless R is so
    # large that the lane-padded (R_pad, 128) f32 copies would eat real VMEM.
    resident = R_pad <= 2048
    if resident:
        sb_spec = pl.BlockSpec((R_pad, 1), lambda i, j: (0, 0))
        kernel = _normalize_kernel_resident
    else:
        sb_spec = pl.BlockSpec((tr, 1), lambda i, j: (i, 0))
        kernel = _normalize_kernel_streamed

    block_bytes = tr * t_hw * itemsize
    sb_bytes = (R_pad if resident else tr) * 128 * 4 * 2 * 2  # 2 arrays x 2 bufs, lane-padded
    vmem_limit = int(max(32 << 20, 4 * block_bytes + sb_bytes + (8 << 20)))

    out2 = pl.pallas_call(
        kernel,
        out_shape=jax.ShapeDtypeStruct((R, HW), x.dtype),
        grid=(grid_r, grid_hw),
        in_specs=[
            pl.BlockSpec((tr, t_hw), lambda i, j: (i, j)),
            sb_spec,
            sb_spec,
        ],
        out_specs=pl.BlockSpec((tr, t_hw), lambda i, j: (i, j)),
        compiler_params=pltpu.CompilerParams(
            dimension_semantics=("parallel", "parallel"),
            vmem_limit_bytes=vmem_limit,
        ),
    )(x2, scale_rows, bias_rows)

    return out2.reshape(N, C, H, W)


if __name__ == "__main__":
    # Deterministic parameters from the module's __init__ (3 channels).
    mean = jnp.array([0.4914, 0.4822, 0.4465], dtype=jnp.float32)
    std = jnp.array([0.247, 0.243, 0.261], dtype=jnp.float32)

    # Small NCHW input consistent with CIFAR-style 3-channel images.
    key = jax.random.PRNGKey(0)
    x = jax.random.uniform(key, (2, 3, 16, 16), dtype=jnp.float32)

    out = normalize(x, mean, std)
    out = jax.block_until_ready(out)

    # Reference check in plain JAX.
    ref = (x - mean[None, :, None, None]) / std[None, :, None, None]
    assert out.shape == x.shape and out.dtype == x.dtype
    assert jnp.allclose(out, ref, atol=1e-5, rtol=1e-5)

    print("KERNEL_OK")
</pallas_src>

<mosaic_0001>
module attributes {stable_mosaic.version = 11 : i64} {
  func.func @_normalize_kernel_resident(%arg0: i32, %arg1: i32, %arg2: memref<6x256xf32, #tpu.memory_space<vmem>>, %arg3: memref<6x1xf32, #tpu.memory_space<vmem>>, %arg4: memref<6x1xf32, #tpu.memory_space<vmem>>, %arg5: memref<6x256xf32, #tpu.memory_space<vmem>>) attributes {dimension_semantics = [#tpu.dimension_semantics<parallel>, #tpu.dimension_semantics<parallel>], iteration_bounds = array<i64: 1, 1>, scalar_prefetch = 0 : i64, scratch_operands = 0 : i64, tpu.core_type = #tpu.core_type<tc>, window_params = [{transform_indices = @transform_0, window_bounds = array<i64: 6, 256>}, {pipeline_mode = #tpu.pipeline_mode<synchronous>, transform_indices = @transform_1, window_bounds = array<i64: 6, 1>}, {pipeline_mode = #tpu.pipeline_mode<synchronous>, transform_indices = @transform_2, window_bounds = array<i64: 6, 1>}, {transform_indices = @transform_3, window_bounds = array<i64: 6, 256>}]} {
    %c6_i32 = arith.constant 6 : i32
    %0 = arith.muli %arg0, %c6_i32 : i32
    %1 = arith.index_cast %0 : i32 to index
    %c0 = arith.constant 0 : index
    %2 = vector.load %arg3[%1, %c0] : memref<6x1xf32, #tpu.memory_space<vmem>>, vector<6x1xf32>
    %3 = arith.index_cast %0 : i32 to index
    %c0_0 = arith.constant 0 : index
    %4 = vector.load %arg4[%3, %c0_0] : memref<6x1xf32, #tpu.memory_space<vmem>>, vector<6x1xf32>
    %c0_1 = arith.constant 0 : index
    %c0_2 = arith.constant 0 : index
    %5 = vector.load %arg2[%c0_1, %c0_2] : memref<6x256xf32, #tpu.memory_space<vmem>>, vector<6x256xf32>
    %6 = vector.broadcast %2 : vector<6x1xf32> to vector<6x256xf32>
    %7 = arith.mulf %5, %6 : vector<6x256xf32>
    %8 = vector.broadcast %4 : vector<6x1xf32> to vector<6x256xf32>
    %9 = arith.addf %7, %8 : vector<6x256xf32>
    %c0_3 = arith.constant 0 : index
    %c0_4 = arith.constant 0 : index
    %10 = vector.load %arg5[%c0_3, %c0_4] : memref<6x256xf32, #tpu.memory_space<vmem>>, vector<6x256xf32>
    tpu.vector_store %arg5[%c0_3, %c0_4], %9 {strides = array<i32>} : memref<6x256xf32, #tpu.memory_space<vmem>>, vector<6x256xf32>,
    return
  }
  func.func @transform_0(%arg0: i32, %arg1: i32) -> (i32, i32) {
    %c0_i32 = arith.constant 0 : i32
    return %arg0, %arg1 : i32, i32
  }
  func.func @transform_1(%arg0: i32, %arg1: i32) -> (i32, i32) {
    %c0_i32 = arith.constant 0 : i32
    %c0_i32_0 = arith.constant 0 : i32
    %c0_i32_1 = arith.constant 0 : i32
    return %c0_i32, %c0_i32_0 : i32, i32
  }
  func.func @transform_2(%arg0: i32, %arg1: i32) -> (i32, i32) {
    %c0_i32 = arith.constant 0 : i32
    %c0_i32_0 = arith.constant 0 : i32
    %c0_i32_1 = arith.constant 0 : i32
    return %c0_i32, %c0_i32_0 : i32, i32
  }
  func.func @transform_3(%arg0: i32, %arg1: i32) -> (i32, i32) {
    %c0_i32 = arith.constant 0 : i32
    return %arg0, %arg1 : i32, i32
  }
}

</mosaic_0001>

<llo_original>
// kernel: tpu_custom_call.1
$region0: #{tpu_custom_call.1}
  #allocation0 [shape = 'u32[]', space=smem, size = 0x4, offset = 0x4, fixed_abs, tag = 'smem constant byte address 0x4 - core index']
  #allocation1 [shape = 'u32[144,128]{1,0:T(1,128)}', space=vmem, size = 0x12000, scoped, tag = 'internal scratch']
  %s0 = inlined_call_operand.vmem [shape: f32[6,256], index: 0, kind: input, shape index: {}]
  %s1 = inlined_call_operand.vmem [shape: f32[6,1], index: 1, kind: input, shape index: {}]
  %s2 = inlined_call_operand.vmem [shape: f32[6,1], index: 2, kind: input, shape index: {}]
  %s3 = inlined_call_operand.hbm [shape: f32[6,256], index: 3, kind: output, shape index: {}]
  %s4 = sld [smem:[#allocation0]]
  $region22: #{tpu_custom_call.1} parent=0
    _
  %s6 = ssub.s32 1, %s4
  %s7 = scalar_select 0, %s6, %s4
  $region1: #{tpu_custom_call.1} parent=0
    #allocation2 [shape = 'u8[8192]{0}', space=vmem, size = 0x2000, scoped, tag = 'output window, operand 0, single buffered']
    #allocation3 [shape = 's32[1]{0}', space=sflag, size = 0x4, scoped, tag = 'scoped memory for tpu_custom_call.1']
    %8 = vsyncpa [#allocation3], 0
    // Predicated region
    $region2: #{tpu_custom_call.1} parent=1 // pred_check
      _
    $region3: #{tpu_custom_call.1} parent=1 // pred_check_branch
      %10 = sbr.rel (0) target = $region5
    $region4: #{tpu_custom_call.1} parent=1 // pred_region
      _
    $region5: #{tpu_custom_call.1} parent=1 // pred_fallthru
      _
    // Predicated region
    $region6: #{tpu_custom_call.1} parent=1 // pred_check
      _
    $region7: #{tpu_custom_call.1} parent=1 // pred_check_branch
      %12 = sbr.rel (0) target = $region9
    $region8: #{tpu_custom_call.1} parent=1 // pred_region
      _
    $region9: #{tpu_custom_call.1} parent=1 // pred_fallthru
      _
    // Predicated region
    $region10: #{tpu_custom_call.1} parent=1 // pred_check
      _
    $region11: #{tpu_custom_call.1} parent=1 // pred_check_branch
      %14 = sbr.rel (0) target = $region13
    $region12: #{tpu_custom_call.1} parent=1 // pred_region
      _
    $region13: #{tpu_custom_call.1} parent=1 // pred_fallthru
      _
    %s15 = smul.u32 0, 6
    %s16 = scalar_lea.vmem %s1, %s15
    %v17 = vld [vmem:[%s16] sm:$0x3f]
    %s18 = scalar_lea.vmem %s2, %s15
    %v19 = vld [vmem:[%s18] sm:$0x3f]
    %v20 = vld [vmem:[%s0] sm:$0x3f]
    %v21 = vld [vmem:[%s0 + $0x8] sm:$0x3f]
    %23 = vset.pattern.permute.xlu0 0
    %24 = vperm.xlu0 %23, %v17
    %v25 = vpop.permute.xlu0 %24
    %v27 = vmul.f32 %v20, %v25
    %v28 = vmul.f32 %v21, %v25
    %30 = vset.pattern.permute.xlu0 0
    %31 = vperm.xlu0 %30, %v19
    %v32 = vpop.permute.xlu0 %31
    %v34 = vadd.f32 %v27, %v32
    %v35 = vadd.f32 %v28, %v32
    %36 = vst [vmem:[#allocation2] sm:$0x3f] %v34
    %37 = vst [vmem:[#allocation2 + $0x8] sm:$0x3f] %v35
    // Predicated region
    $region14: #{tpu_custom_call.1} parent=1 // pred_check
      _
    $region15: #{tpu_custom_call.1} parent=1 // pred_check_branch
      %39 = sbr.rel (0) target = $region17
    $region16: #{tpu_custom_call.1} parent=1 // pred_region
      %s41 = ssub.s32 256, 256
      %42 = vsyncadd [#allocation3], %s41
      %s44 = sshll.u32 [#allocation2], 4
      %s45 = int_to_ptr.vmem [resolvable:$true] %s44
      %47 = dma.vmem_to_hbm [thread:$0]  %s45, 256, %s3, [#allocation3]
    $region17: #{tpu_custom_call.1} parent=1 // pred_fallthru
      _
    // Predicated region
    $region18: #{tpu_custom_call.1} parent=1 // pred_check
      _
    $region19: #{tpu_custom_call.1} parent=1 // pred_check_branch
      %49 = sbr.rel (0) target = $region21
    $region20: #{tpu_custom_call.1} parent=1 // pred_region
      %50 = dma.done [#allocation3], 256
    $region21: #{tpu_custom_call.1} parent=1 // pred_fallthru
      _
    %51 = vsyncpa [#allocation3], 1

</llo_original>
